<compile_context>
chip_gen: v5e
topology: v5e:2x2
jax: 0.10.0
libtpu: 0.0.40
codegen_flags: <defaults>
</compile_context>

<pallas_src>
import functools

import jax
import jax.numpy as jnp
from jax import lax
from jax.experimental import pallas as pl
from jax.experimental.pallas import tpu as pltpu


def _bit_masks(c1: int, c2: int, t: int, num_qubits: int):
    """Bit masks matching BuiltCCNOT._calculate_matrix's qubit ordering."""
    c1_mask = 1 << (num_qubits - c1 - 1)
    c2_mask = 1 << (num_qubits - c2 - 1)
    t_mask = 1 << (num_qubits - t - 1)
    return c1_mask, c2_mask, t_mask


def _ccnot_perm_kernel(re_ref, im_ref, ore_ref, oim_ref, *,
                       c1_mask: int, c2_mask: int, t_mask: int):
    # re_ref / im_ref: (tb, dim) f32 tiles of the real / imaginary planes.
    shape = re_ref.shape
    dim = shape[-1]
    last = len(shape) - 1

    lane = lax.broadcasted_iota(jnp.int32, shape, dimension=last)   # column index j
    controls_on = ((lane & c1_mask) != 0) & ((lane & c2_mask) != 0)
    t_bit_set = (lane & t_mask) != 0

    def apply(x):
        # Want y[j] = x[j ^ t_mask] on the lanes where the controls are on:
        #   t bit set in j   -> x[j - t_mask] == roll(x, +t_mask)[j]
        #   t bit clear in j -> x[j + t_mask] == roll(x, dim - t_mask)[j]
        fwd = pltpu.roll(x, t_mask, last)
        bwd = pltpu.roll(x, dim - t_mask, last)
        swapped = jnp.where(t_bit_set, fwd, bwd)
        return jnp.where(controls_on, swapped, x)

    ore_ref[...] = apply(re_ref[...])
    oim_ref[...] = apply(im_ref[...])


def _pick_batch_tile(batch: int) -> int:
    """Largest batch tile <= 256 that divides batch and keeps (8,128) tiling."""
    if batch % 8 != 0:
        return batch          # single full-extent block (allowed by Pallas)
    tb = min(batch, 256)
    while batch % tb != 0:
        tb -= 8
    return tb


def ccnot_forward(state: jnp.ndarray, c1: int, c2: int, t: int,
                  num_qubits: int) -> jnp.ndarray:
    """Apply CCNOT to a (batch, 2**num_qubits) complex64 statevector."""
    batch, dim = state.shape
    assert dim == 2 ** num_qubits
    c1_mask, c2_mask, t_mask = _bit_masks(c1, c2, t, num_qubits)

    re = jnp.real(state).astype(jnp.float32)
    im = jnp.imag(state).astype(jnp.float32)

    tb = _pick_batch_tile(batch)
    grid = (pl.cdiv(batch, tb),)

    kernel = functools.partial(
        _ccnot_perm_kernel, c1_mask=c1_mask, c2_mask=c2_mask, t_mask=t_mask)

    bytes_accessed = 4 * batch * dim * 4          # 2 inputs + 2 outputs, f32
    cost = pl.CostEstimate(flops=8 * batch * dim, transcendentals=0,
                           bytes_accessed=bytes_accessed)

    out_re, out_im = pl.pallas_call(
        kernel,
        out_shape=(jax.ShapeDtypeStruct((batch, dim), jnp.float32),
                   jax.ShapeDtypeStruct((batch, dim), jnp.float32)),
        grid=grid,
        in_specs=[pl.BlockSpec((tb, dim), lambda i: (i, 0)),
                  pl.BlockSpec((tb, dim), lambda i: (i, 0))],
        out_specs=(pl.BlockSpec((tb, dim), lambda i: (i, 0)),
                   pl.BlockSpec((tb, dim), lambda i: (i, 0))),
        compiler_params=pltpu.CompilerParams(
            dimension_semantics=("parallel",)),   # independent batch tiles
        cost_estimate=cost,
    )(re, im)

    return lax.complex(out_re, out_im).astype(jnp.complex64)


def _ccnot_matrix(c1: int, c2: int, t: int, num_qubits: int) -> jnp.ndarray:
    """Dense CCNOT matrix (verification only), mirrors BuiltCCNOT._calculate_matrix."""
    dim = 2 ** num_qubits
    indices = jnp.arange(dim)
    c1_mask, c2_mask, t_mask = _bit_masks(c1, c2, t, num_qubits)
    are_controls_on = ((indices & c1_mask) != 0) & ((indices & c2_mask) != 0)
    target_indices = jnp.where(are_controls_on, indices ^ t_mask, indices)
    return jnp.zeros((dim, dim), jnp.float32).at[indices, target_indices].set(1.0)


if __name__ == "__main__":
    # Small shapes consistent with the module: num_qubits = 7 -> dim = 128.
    num_qubits = 7
    control1, control2, target = 0, 1, 3
    dim = 2 ** num_qubits
    batch = 8

    key = jax.random.PRNGKey(0)
    kr, ki = jax.random.split(key)
    state = (
        jax.random.normal(kr, (batch, dim), dtype=jnp.float32)
        + 1j * jax.random.normal(ki, (batch, dim), dtype=jnp.float32)
    ).astype(jnp.complex64)

    out = ccnot_forward(state, control1, control2, target, num_qubits)
    out = jax.block_until_ready(out)

    # Reference: plain complex matmul against the dense matrix (torch `state @ M`).
    M = _ccnot_matrix(control1, control2, target, num_qubits)
    ref = state @ M.astype(jnp.complex64)

    assert out.shape == (batch, dim) and out.dtype == jnp.complex64
    assert jnp.max(jnp.abs(out - ref)) < 1e-5

    print("KERNEL_OK")
</pallas_src>

<mosaic_0001>
module attributes {stable_mosaic.version = 11 : i64} {
  func.func @_ccnot_perm_kernel(%arg0: i32, %arg1: memref<8x128xf32, #tpu.memory_space<vmem>>, %arg2: memref<8x128xf32, #tpu.memory_space<vmem>>, %arg3: memref<8x128xf32, #tpu.memory_space<vmem>>, %arg4: memref<8x128xf32, #tpu.memory_space<vmem>>) attributes {dimension_semantics = [#tpu.dimension_semantics<parallel>], iteration_bounds = array<i64: 1>, scalar_prefetch = 0 : i64, scratch_operands = 0 : i64, tpu.core_type = #tpu.core_type<tc>, window_params = [{transform_indices = @transform_0, window_bounds = array<i64: 8, 128>}, {transform_indices = @transform_1, window_bounds = array<i64: 8, 128>}, {transform_indices = @transform_2, window_bounds = array<i64: 8, 128>}, {transform_indices = @transform_3, window_bounds = array<i64: 8, 128>}]} {
    %0 = tpu.iota {dimensions = array<i32: 1>} : vector<8x128xi32>
    %c64_i32 = arith.constant 64 : i32
    %1 = vector.broadcast %c64_i32 : i32 to vector<8x128xi32>
    %2 = arith.andi %0, %1 : vector<8x128xi32>
    %c0_i32 = arith.constant 0 : i32
    %3 = vector.broadcast %c0_i32 : i32 to vector<8x128xi32>
    %4 = arith.cmpi ne, %2, %3 : vector<8x128xi32>
    %c32_i32 = arith.constant 32 : i32
    %5 = vector.broadcast %c32_i32 : i32 to vector<8x128xi32>
    %6 = arith.andi %0, %5 : vector<8x128xi32>
    %c0_i32_0 = arith.constant 0 : i32
    %7 = vector.broadcast %c0_i32_0 : i32 to vector<8x128xi32>
    %8 = arith.cmpi ne, %6, %7 : vector<8x128xi32>
    %9 = arith.andi %4, %8 : vector<8x128xi1>
    %c8_i32 = arith.constant 8 : i32
    %10 = vector.broadcast %c8_i32 : i32 to vector<8x128xi32>
    %11 = arith.andi %0, %10 : vector<8x128xi32>
    %c0_i32_1 = arith.constant 0 : i32
    %12 = vector.broadcast %c0_i32_1 : i32 to vector<8x128xi32>
    %13 = arith.cmpi ne, %11, %12 : vector<8x128xi32>
    %c0 = arith.constant 0 : index
    %c0_2 = arith.constant 0 : index
    %14 = vector.load %arg1[%c0, %c0_2] : memref<8x128xf32, #tpu.memory_space<vmem>>, vector<8x128xf32>
    %c8_i32_3 = arith.constant 8 : i32
    %15 = tpu.dynamic_rotate %14 by %c8_i32_3 dim 1 : vector<8x128xf32>, i32 -> vector<8x128xf32>
    %c120_i32 = arith.constant 120 : i32
    %16 = tpu.dynamic_rotate %14 by %c120_i32 dim 1 : vector<8x128xf32>, i32 -> vector<8x128xf32>
    %17 = arith.select %13, %15, %16 : vector<8x128xi1>, vector<8x128xf32>
    %18 = arith.select %9, %17, %14 : vector<8x128xi1>, vector<8x128xf32>
    %c0_4 = arith.constant 0 : index
    %c0_5 = arith.constant 0 : index
    %19 = vector.load %arg3[%c0_4, %c0_5] : memref<8x128xf32, #tpu.memory_space<vmem>>, vector<8x128xf32>
    tpu.vector_store %arg3[%c0_4, %c0_5], %18 {strides = array<i32>} : memref<8x128xf32, #tpu.memory_space<vmem>>, vector<8x128xf32>,
    %c0_6 = arith.constant 0 : index
    %c0_7 = arith.constant 0 : index
    %20 = vector.load %arg2[%c0_6, %c0_7] : memref<8x128xf32, #tpu.memory_space<vmem>>, vector<8x128xf32>
    %c8_i32_8 = arith.constant 8 : i32
    %21 = tpu.dynamic_rotate %20 by %c8_i32_8 dim 1 : vector<8x128xf32>, i32 -> vector<8x128xf32>
    %c120_i32_9 = arith.constant 120 : i32
    %22 = tpu.dynamic_rotate %20 by %c120_i32_9 dim 1 : vector<8x128xf32>, i32 -> vector<8x128xf32>
    %23 = arith.select %13, %21, %22 : vector<8x128xi1>, vector<8x128xf32>
    %24 = arith.select %9, %23, %20 : vector<8x128xi1>, vector<8x128xf32>
    %c0_10 = arith.constant 0 : index
    %c0_11 = arith.constant 0 : index
    %25 = vector.load %arg4[%c0_10, %c0_11] : memref<8x128xf32, #tpu.memory_space<vmem>>, vector<8x128xf32>
    tpu.vector_store %arg4[%c0_10, %c0_11], %24 {strides = array<i32>} : memref<8x128xf32, #tpu.memory_space<vmem>>, vector<8x128xf32>,
    return
  }
  func.func @transform_0(%arg0: i32) -> (i32, i32) {
    %c0_i32 = arith.constant 0 : i32
    %c0_i32_0 = arith.constant 0 : i32
    return %arg0, %c0_i32 : i32, i32
  }
  func.func @transform_1(%arg0: i32) -> (i32, i32) {
    %c0_i32 = arith.constant 0 : i32
    %c0_i32_0 = arith.constant 0 : i32
    return %arg0, %c0_i32 : i32, i32
  }
  func.func @transform_2(%arg0: i32) -> (i32, i32) {
    %c0_i32 = arith.constant 0 : i32
    %c0_i32_0 = arith.constant 0 : i32
    return %arg0, %c0_i32 : i32, i32
  }
  func.func @transform_3(%arg0: i32) -> (i32, i32) {
    %c0_i32 = arith.constant 0 : i32
    %c0_i32_0 = arith.constant 0 : i32
    return %arg0, %c0_i32 : i32, i32
  }
}

</mosaic_0001>

<llo_original>
// kernel: tpu_custom_call.1
$region0: #{tpu_custom_call.1}
  #allocation0 [shape = 'u32[]', space=smem, size = 0x4, offset = 0x4, fixed_abs, tag = 'smem constant byte address 0x4 - core index']
  #allocation1 [shape = 'u32[72,128]{1,0:T(1,128)}', space=vmem, size = 0x9000, scoped, tag = 'internal scratch']
  %s0 = inlined_call_operand.hbm [shape: f32[8,128], index: 0, kind: input, shape index: {}]
  %s1 = inlined_call_operand.hbm [shape: f32[8,128], index: 1, kind: input, shape index: {}]
  %s2 = inlined_call_operand.hbm [shape: f32[8,128], index: 2, kind: output, shape index: {0}]
  %s3 = inlined_call_operand.hbm [shape: f32[8,128], index: 3, kind: output, shape index: {1}]
  %4 = xla_tuple %s2, %s3
  %s5 = sld [smem:[#allocation0]]
  $region34: #{tpu_custom_call.1} parent=0
    _
  %s7 = ssub.s32 1, %s5
  %s8 = scalar_select 0, %s7, %s5
  $region1: #{tpu_custom_call.1} parent=0
    #allocation2 [shape = 'u8[4096]{0}', space=vmem, size = 0x1000, scoped, tag = 'input window, operand 0, single buffered']
    #allocation3 [shape = 's32[1]{0}', space=sflag, size = 0x4, scoped, tag = 'scoped memory for tpu_custom_call.1']
    #allocation4 [shape = 's32[1]{0}', space=sflag, size = 0x4, scoped, tag = 'scoped memory for tpu_custom_call.1']
    #allocation5 [shape = 'u8[4096]{0}', space=vmem, size = 0x1000, scoped, tag = 'input window, operand 1, single buffered']
    #allocation6 [shape = 's32[1]{0}', space=sflag, size = 0x4, scoped, tag = 'scoped memory for tpu_custom_call.1']
    #allocation7 [shape = 'u8[4096]{0}', space=vmem, size = 0x1000, scoped, tag = 'output window, operand 0, single buffered']
    #allocation8 [shape = 'u8[4096]{0}', space=vmem, size = 0x1000, scoped, tag = 'output window, operand 1, single buffered']
    #allocation9 [shape = 's32[1]{0}', space=sflag, size = 0x4, scoped, tag = 'scoped memory for tpu_custom_call.1']
    %9 = vsyncpa [#allocation3], 0
    %10 = vsyncpa [#allocation6], 0
    %11 = vsyncpa [#allocation4], 0
    %12 = vsyncpa [#allocation9], 0
    // Predicated region
    $region2: #{tpu_custom_call.1} parent=1 // pred_check
      _
    $region3: #{tpu_custom_call.1} parent=1 // pred_check_branch
      %14 = sbr.rel (0) target = $region5
    $region4: #{tpu_custom_call.1} parent=1 // pred_region
      %16 = vsyncadd [#allocation3], 0
      %s18 = sshll.u32 %s0, 4
      %s19 = int_to_ptr.hbm [resolvable:$true] %s18
      %s20 = sshll.u32 [#allocation2], 4
      %s21 = int_to_ptr.vmem [resolvable:$true] %s20
      %23 = dma.hbm_to_vmem [thread:$0]  %s19, 128, %s21, [#allocation3]
    $region5: #{tpu_custom_call.1} parent=1 // pred_fallthru
      _
    // Predicated region
    $region6: #{tpu_custom_call.1} parent=1 // pred_check
      _
    $region7: #{tpu_custom_call.1} parent=1 // pred_check_branch
      %25 = sbr.rel (0) target = $region9
    $region8: #{tpu_custom_call.1} parent=1 // pred_region
      %27 = vsyncadd [#allocation6], 0
      %s29 = sshll.u32 %s1, 4
      %s30 = int_to_ptr.hbm [resolvable:$true] %s29
      %s31 = sshll.u32 [#allocation5], 4
      %s32 = int_to_ptr.vmem [resolvable:$true] %s31
      %34 = dma.hbm_to_vmem [thread:$0]  %s30, 128, %s32, [#allocation6]
    $region9: #{tpu_custom_call.1} parent=1 // pred_fallthru
      _
    // Predicated region
    $region10: #{tpu_custom_call.1} parent=1 // pred_check
      _
    $region11: #{tpu_custom_call.1} parent=1 // pred_check_branch
      %36 = sbr.rel (0) target = $region13
    $region12: #{tpu_custom_call.1} parent=1 // pred_region
      %38 = dma.done [#allocation3], 128
    $region13: #{tpu_custom_call.1} parent=1 // pred_fallthru
      _
    // Predicated region
    $region14: #{tpu_custom_call.1} parent=1 // pred_check
      _
    $region15: #{tpu_custom_call.1} parent=1 // pred_check_branch
      %40 = sbr.rel (0) target = $region17
    $region16: #{tpu_custom_call.1} parent=1 // pred_region
      %42 = dma.done [#allocation6], 128
    $region17: #{tpu_custom_call.1} parent=1 // pred_fallthru
      _
    %v43 = vlaneseq
    %v44 = vand.u32 %v43, 127
    %v45 = vand.u32 %v44, 64
    %vm46 = vcmp.ne.s32.totalorder %v45, 0
    %v47 = vand.u32 %v44, 32
    %vm48 = vcmp.ne.s32.totalorder %v47, 0
    %vm49 = vmand %vm46, %vm48
    %v50 = vand.u32 %v44, 8
    %vm51 = vcmp.ne.s32.totalorder %v50, 0
    %v52 = vld [vmem:[#allocation2] sm:$0xff]
    %53 = vrot.lane.b32.xlu0 %v52, 8
    %v54 = vpop.permute.xlu0 %53
    %55 = vrot.lane.b32.xlu0 %v52, 120
    %v56 = vpop.permute.xlu0 %55
    %v57 = vsel %vm51, %v54, %v56
    %v58 = vsel %vm49, %v57, %v52
    %59 = vst [vmem:[#allocation7] sm:$0xff] %v58
    %v60 = vld [vmem:[#allocation5] sm:$0xff]
    %61 = vrot.lane.b32.xlu0 %v60, 8
    %v62 = vpop.permute.xlu0 %61
    %63 = vrot.lane.b32.xlu0 %v60, 120
    %v64 = vpop.permute.xlu0 %63
    %v65 = vsel %vm51, %v62, %v64
    %v66 = vsel %vm49, %v65, %v60
    %67 = vst [vmem:[#allocation8] sm:$0xff] %v66
    // Predicated region
    $region18: #{tpu_custom_call.1} parent=1 // pred_check
      _
    $region19: #{tpu_custom_call.1} parent=1 // pred_check_branch
      %69 = sbr.rel (0) target = $region21
    $region20: #{tpu_custom_call.1} parent=1 // pred_region
      %71 = vsyncadd [#allocation4], 0
      %s73 = sshll.u32 [#allocation7], 4
      %s74 = int_to_ptr.vmem [resolvable:$true] %s73
      %s75 = sshll.u32 %s2, 4
      %s76 = int_to_ptr.hbm [resolvable:$true] %s75
      %78 = dma.vmem_to_hbm [thread:$0]  %s74, 128, %s76, [#allocation4]
    $region21: #{tpu_custom_call.1} parent=1 // pred_fallthru
      _
    // Predicated region
    $region22: #{tpu_custom_call.1} parent=1 // pred_check
      _
    $region23: #{tpu_custom_call.1} parent=1 // pred_check_branch
      %80 = sbr.rel (0) target = $region25
    $region24: #{tpu_custom_call.1} parent=1 // pred_region
      %82 = vsyncadd [#allocation9], 0
      %s84 = sshll.u32 [#allocation8], 4
      %s85 = int_to_ptr.vmem [resolvable:$true] %s84
      %s86 = sshll.u32 %s3, 4
      %s87 = int_to_ptr.hbm [resolvable:$true] %s86
      %89 = dma.vmem_to_hbm [thread:$0]  %s85, 128, %s87, [#allocation9]
    $region25: #{tpu_custom_call.1} parent=1 // pred_fallthru
      _
    // Predicated region
    $region26: #{tpu_custom_call.1} parent=1 // pred_check
      _
    $region27: #{tpu_custom_call.1} parent=1 // pred_check_branch
      %91 = sbr.rel (0) target = $region29
    $region28: #{tpu_custom_call.1} parent=1 // pred_region
      %93 = dma.done [#allocation4], 128
    $region29: #{tpu_custom_call.1} parent=1 // pred_fallthru
      _
    // Predicated region
    $region30: #{tpu_custom_call.1} parent=1 // pred_check
      _
    $region31: #{tpu_custom_call.1} parent=1 // pred_check_branch
      %95 = sbr.rel (0) target = $region33
    $region32: #{tpu_custom_call.1} parent=1 // pred_region
      %97 = dma.done [#allocation9], 128
    $region33: #{tpu_custom_call.1} parent=1 // pred_fallthru
      _
    %98 = vsyncpa [#allocation3], 1
    %99 = vsyncpa [#allocation6], 1
    %100 = vsyncpa [#allocation4], 1
    %101 = vsyncpa [#allocation9], 1

</llo_original>
